<compile_context>
chip_gen: v7x
topology: tpu7x:2x2x1
jax: 0.10.0
libtpu: 0.0.40
codegen_flags: <defaults>
</compile_context>

<pallas_src>
import functools

import jax
import jax.numpy as jnp
from jax.experimental import pallas as pl
from jax.experimental.pallas import tpu as pltpu

_COMPUTE_DTYPE = jnp.bfloat16


# ------------------------------ helpers ---------------------------------------
def _vmem_limit_bytes():
    """Generation-aware scoped-VMEM budget (v7x: 64 MiB physical, v5e/v6e: 128 MiB)."""
    try:
        cap = pltpu.get_tpu_info().vmem_capacity_bytes
    except Exception:  # pragma: no cover - conservative (v7x-sized) fallback
        cap = 64 * 1024 * 1024
    # ~38 MiB scoped on v7x, ~77 MiB on v5e/v6e.
    return int(min(cap * 3 // 5, 80 * 1024 * 1024))


def _const_spec(block_shape, index_map):
    """BlockSpec for a grid-constant operand: fetched once, single-buffered."""
    try:
        return pl.BlockSpec(block_shape, index_map, pipeline_mode=pl.Buffered(1))
    except Exception:  # pragma: no cover - older jax without pipeline_mode support
        return pl.BlockSpec(block_shape, index_map)


def _pick_batch_tile(batch, seq, d, h, num_classes, vmem_budget):
    """Batch items per grid step: capped small, VMEM-bounded, >=2 grid steps when possible."""
    if seq % 8 != 0:
        return batch  # (8,128) rule: the [TB*S, D] row block must then equal the full array
    const = 8 * d * h + 2 * num_classes * d * d                 # resident weights (bf16)
    per_b = seq * (8 * d                                        # x1/x2 bf16, double-buffered
                   + 4 * h + 16 * d + 6 * num_classes * d       # f32/bf16 temporaries
                   + 8 * num_classes * seq)                     # f32 out block, double-buffered
    budget = max(vmem_budget // 2 - const, per_b)
    tb = max(1, min(4, batch, budget // max(per_b, 1)))
    while batch % tb:
        tb -= 1
    # Keep >=2 grid steps (input/output DMA overlap + v7x 2-TensorCore sharding).
    while tb > 1 and batch // tb < 2:
        tb -= 1
        while batch % tb:
            tb -= 1
    return tb


# ------------------------------ fused kernel -----------------------------------
def _biaffine_fused_kernel(x1_ref, x2_ref, w1_ref, b1_ref, w2_ref, b2_ref,
                           u_core_ref, u_col_ref, u_row_ref, u_bias_ref,
                           o_ref, *, tb, seq, num_classes):
    cdt = x1_ref.dtype  # bf16 compute dtype for MXU operands (f32 accumulation)

    def ffnn(x_ref, plane):
        x = x_ref[...]                                                     # [TB*S, D]
        h = jax.nn.sigmoid(
            jnp.dot(x, w1_ref[plane], preferred_element_type=jnp.float32) + b1_ref[plane])
        # TODO(synk): nn.Dropout is identity here (inference / eval mode).
        v = jax.nn.sigmoid(
            jnp.dot(h.astype(cdt), w2_ref[plane], preferred_element_type=jnp.float32)
            + b2_ref[plane])
        return v.astype(cdt)

    v1 = ffnn(x1_ref, 0)       # span_start activations  [TB*S, D]
    v2 = ffnn(x2_ref, 1)       # span_end activations    [TB*S, D]

    # ---- v1-side matmuls hoisted over the whole [TB*S, D] block (good MXU fill) ----
    # r1[i, c] = sum_p v1[i,p] * U[p,c,D] + U[D,c,D]   (q = D column of the bilinear map)
    r1 = jnp.dot(v1, u_row_ref[...], preferred_element_type=jnp.float32) + u_bias_ref[...]
    # m_c[i, q] = sum_p v1[i,p] * U[p,c,q] + U[D,c,q]  (+1 row folded in as a bias)
    m_list = []
    for c in range(num_classes):                       # static, small (C = numClasses)
        m_c = (jnp.dot(v1, u_core_ref[c], preferred_element_type=jnp.float32)
               + u_col_ref[c])
        m_list.append(m_c.astype(cdt))

    # ---- per-batch-item epilogue (tb is capped <= 4: cheap static unroll) ----------
    for t in range(tb):
        lo = t * seq
        v2t = v2[lo:lo + seq, :].T                     # one XLU transpose per batch item
        r1_t = r1[lo:lo + seq, :]                      # [S, C] f32
        for c in range(num_classes):
            core = jnp.dot(m_list[c][lo:lo + seq, :], v2t,
                           preferred_element_type=jnp.float32)              # [S, S]
            o_ref[t, c] = (core + r1_t[:, c:c + 1]).astype(o_ref.dtype)


# ------------------------------ wrapper (full module) ---------------------------
def biaffine_forward(start_repr, end_repr, params, num_classes=2,
                     out_dtype=jnp.float32, torch_layout=True):
    """start/end representations [B, S, D] -> biaffine scores.

    torch_layout=True returns the PyTorch [B, S, S, C] layout; False returns the
    kernel-native lane-friendly [B, C, S, S] layout (skips the final transpose)."""
    B, S, D = start_repr.shape
    C = num_classes
    H = params["s_w1"].shape[1]
    cdt = _COMPUTE_DTYPE

    x1 = start_repr.reshape(B * S, D).astype(cdt)
    x2 = end_repr.reshape(B * S, D).astype(cdt)

    # Stacked FFNN weights: plane 0 = span_start, plane 1 = span_end.
    w1 = jnp.stack([params["s_w1"], params["e_w1"]]).astype(cdt)            # [2, D, H]
    b1 = jnp.stack([params["s_b1"], params["e_b1"]]).astype(jnp.float32)    # [2, 1, H]
    w2 = jnp.stack([params["s_w2"], params["e_w2"]]).astype(cdt)            # [2, H, D]
    b2 = jnp.stack([params["s_b2"], params["e_b2"]]).astype(jnp.float32)    # [2, 1, D]

    # Algebraic split of the +1 augmentation of U[D+1, C, D+1] (class-major layout
    # so the kernel never slices the lane axis at a non-128-aligned offset).
    u = params["u"].astype(jnp.float32)
    u_core = jnp.transpose(u[:D, :, :D], (1, 0, 2)).astype(cdt)             # [C, D, D]
    u_col = u[D, :, :D].reshape(C, 1, D).astype(jnp.float32)                # [C, 1, D]
    u_row = u[:D, :, D].astype(cdt)                                         # [D, C]
    u_bias = u[D, :, D].reshape(1, C).astype(jnp.float32)                   # [1, C]

    vmem_limit = _vmem_limit_bytes()
    TB = _pick_batch_tile(B, S, D, H, C, vmem_limit)
    grid = (B // TB,)

    itemsize = jnp.dtype(cdt).itemsize
    out_itemsize = jnp.dtype(out_dtype).itemsize
    cost = pl.CostEstimate(
        flops=int(8 * B * S * D * H                 # two 2-layer FFNNs
                  + 2 * B * S * C * D * D           # v1-side dense core
                  + 2 * B * C * S * S * D           # per-class [S, S] core
                  + 2 * B * S * C * D),             # rank-1 column term
        transcendentals=int(2 * B * S * (H + D)),   # sigmoids
        bytes_accessed=int(2 * B * S * D * itemsize
                           + (4 * D * H + C * D * D + 2 * C * D) * itemsize
                           + B * C * S * S * out_itemsize),
    )

    kernel = functools.partial(_biaffine_fused_kernel, tb=TB, seq=S, num_classes=C)

    out = pl.pallas_call(
        kernel,
        out_shape=jax.ShapeDtypeStruct((B, C, S, S), out_dtype),
        grid=grid,
        in_specs=[
            pl.BlockSpec((TB * S, D), lambda b: (b, 0)),        # start rows (streamed)
            pl.BlockSpec((TB * S, D), lambda b: (b, 0)),        # end rows   (streamed)
            _const_spec((2, D, H), lambda b: (0, 0, 0)),        # fc1 weights (resident)
            _const_spec((2, 1, H), lambda b: (0, 0, 0)),        # fc1 biases
            _const_spec((2, H, D), lambda b: (0, 0, 0)),        # fc2 weights
            _const_spec((2, 1, D), lambda b: (0, 0, 0)),        # fc2 biases
            _const_spec((C, D, D), lambda b: (0, 0, 0)),        # bilinear core
            _const_spec((C, 1, D), lambda b: (0, 0, 0)),        # +1-row term
            _const_spec((D, C), lambda b: (0, 0)),              # +1-column term
            _const_spec((1, C), lambda b: (0, 0)),              # scalar term
        ],
        out_specs=pl.BlockSpec((TB, C, S, S), lambda b: (b, 0, 0, 0)),
        compiler_params=pltpu.CompilerParams(
            dimension_semantics=("parallel",),
            vmem_limit_bytes=vmem_limit),
        cost_estimate=cost,
    )(x1, x2, w1, b1, w2, b2, u_core, u_col, u_row, u_bias)

    if torch_layout:
        # [B, C, S, S] -> PyTorch layout [B, S, S, C] (API parity only; skip if the
        # consumer accepts the kernel-native layout).
        return jnp.transpose(out, (0, 2, 3, 1))
    return out


# ------------------------------ params & reference ------------------------------
def init_params(key, input_size, hidden_size, num_classes=2):
    D, H = input_size, hidden_size
    ks = jax.random.split(key, 9)

    # torch nn.Linear stores W as [out, in]; kernels consume W.T ([in, out]).
    def lin(kw, kb, fan_in, fan_out):
        bound = 1.0 / jnp.sqrt(fan_in)
        w = jax.random.uniform(kw, (fan_out, fan_in), jnp.float32, -bound, bound)
        b = jax.random.uniform(kb, (1, fan_out), jnp.float32, -bound, bound)
        return w.T, b

    s_w1, s_b1 = lin(ks[0], ks[1], D, H)
    s_w2, s_b2 = lin(ks[2], ks[3], H, D)
    e_w1, e_b1 = lin(ks[4], ks[5], D, H)
    e_w2, e_b2 = lin(ks[6], ks[7], H, D)
    # Bilinear map, torch shape [D+1, numClasses, D+1] (uninitialized nn.Parameter in
    # the torch spec; initialized deterministically here).
    u = jax.random.normal(ks[8], (D + 1, num_classes, D + 1), jnp.float32) * 0.1
    return dict(s_w1=s_w1, s_b1=s_b1, s_w2=s_w2, s_b2=s_b2,
                e_w1=e_w1, e_b1=e_b1, e_w2=e_w2, e_b2=e_b2, u=u)


def reference_forward(start_repr, end_repr, params, num_classes=2):
    def ffnn_ref(x, w1, b1, w2, b2):
        h = jax.nn.sigmoid(x @ w1 + b1)
        return jax.nn.sigmoid(h @ w2 + b2)

    v1 = ffnn_ref(start_repr, params["s_w1"], params["s_b1"],
                  params["s_w2"], params["s_b2"])
    v2 = ffnn_ref(end_repr, params["e_w1"], params["e_b1"],
                  params["e_w2"], params["e_b2"])
    B, S, _ = v1.shape
    ones = jnp.ones((B, S, 1), v1.dtype)
    v1 = jnp.concatenate([v1, ones], axis=2)
    v2 = jnp.concatenate([v2, ones], axis=2)
    # out[b, i, j, c] = sum_{p,q} v1[b,i,p] U[p,c,q] v2[b,j,q]
    return jnp.einsum("bip,pcq,bjq->bijc", v1, params["u"], v2)


if __name__ == "__main__":
    B, S, D, H, C = 2, 8, 32, 16, 2
    key = jax.random.PRNGKey(0)
    k_s, k_e, k_p = jax.random.split(key, 3)
    start_repr = jax.random.normal(k_s, (B, S, D), jnp.float32)
    end_repr = jax.random.normal(k_e, (B, S, D), jnp.float32)
    params = init_params(k_p, D, H, C)

    out = jax.block_until_ready(biaffine_forward(start_repr, end_repr, params, C))
    ref = reference_forward(start_repr, end_repr, params, C)

    assert out.shape == (B, S, S, C), out.shape
    # bf16 MXU operands (f32 accumulation) -> loosened tolerance vs. the f32 reference.
    max_err = float(jnp.max(jnp.abs(out - ref)))
    assert jnp.allclose(out, ref, atol=5e-2, rtol=5e-2), f"mismatch, max_err={max_err}"
    print("KERNEL_OK")
</pallas_src>

<mosaic_0001>
module attributes {stable_mosaic.version = 11 : i64} {
  func.func @_biaffine_fused_kernel(%arg0: i32, %arg1: memref<8x32xbf16, #tpu.memory_space<vmem>>, %arg2: memref<8x32xbf16, #tpu.memory_space<vmem>>, %arg3: memref<2x32x16xbf16, #tpu.memory_space<vmem>>, %arg4: memref<2x1x16xf32, #tpu.memory_space<vmem>>, %arg5: memref<2x16x32xbf16, #tpu.memory_space<vmem>>, %arg6: memref<2x1x32xf32, #tpu.memory_space<vmem>>, %arg7: memref<2x32x32xbf16, #tpu.memory_space<vmem>>, %arg8: memref<2x1x32xf32, #tpu.memory_space<vmem>>, %arg9: memref<32x2xbf16, #tpu.memory_space<vmem>>, %arg10: memref<1x2xf32, #tpu.memory_space<vmem>>, %arg11: memref<1x2x8x8xf32, #tpu.memory_space<vmem>>) attributes {dimension_semantics = [#tpu.dimension_semantics<parallel>], iteration_bounds = array<i64: 2>, scalar_prefetch = 0 : i64, scratch_operands = 0 : i64, tpu.core_type = #tpu.core_type<tc>, window_params = [{transform_indices = @transform_0, window_bounds = array<i64: 8, 32>}, {transform_indices = @transform_1, window_bounds = array<i64: 8, 32>}, {pipeline_mode = #tpu.pipeline_mode<synchronous>, transform_indices = @transform_2, window_bounds = array<i64: 2, 32, 16>}, {pipeline_mode = #tpu.pipeline_mode<synchronous>, transform_indices = @transform_3, window_bounds = array<i64: 2, 1, 16>}, {pipeline_mode = #tpu.pipeline_mode<synchronous>, transform_indices = @transform_4, window_bounds = array<i64: 2, 16, 32>}, {pipeline_mode = #tpu.pipeline_mode<synchronous>, transform_indices = @transform_5, window_bounds = array<i64: 2, 1, 32>}, {pipeline_mode = #tpu.pipeline_mode<synchronous>, transform_indices = @transform_6, window_bounds = array<i64: 2, 32, 32>}, {pipeline_mode = #tpu.pipeline_mode<synchronous>, transform_indices = @transform_7, window_bounds = array<i64: 2, 1, 32>}, {pipeline_mode = #tpu.pipeline_mode<synchronous>, transform_indices = @transform_8, window_bounds = array<i64: 32, 2>}, {pipeline_mode = #tpu.pipeline_mode<synchronous>, transform_indices = @transform_9, window_bounds = array<i64: 1, 2>}, {transform_indices = @transform_10, window_bounds = array<i64: 1, 2, 8, 8>}]} {
    %c0 = arith.constant 0 : index
    %c0_0 = arith.constant 0 : index
    %0 = vector.load %arg1[%c0, %c0_0] : memref<8x32xbf16, #tpu.memory_space<vmem>>, vector<8x32xbf16>
    %c0_1 = arith.constant 0 : index
    %c0_2 = arith.constant 0 : index
    %c0_3 = arith.constant 0 : index
    %1 = vector.load %arg3[%c0_1, %c0_2, %c0_3] : memref<2x32x16xbf16, #tpu.memory_space<vmem>>, vector<1x32x16xbf16>
    %2 = vector.shape_cast %1 : vector<1x32x16xbf16> to vector<32x16xbf16>
    %cst = arith.constant dense<0.000000e+00> : vector<8x16xf32>
    %3 = tpu.matmul %0, %2, %cst {dimension_numbers = #tpu.dot_dimension_numbers<[1], [0], [0], [1], [0, 0, 1, 1], [], []>} : vector<8x32xbf16>, vector<32x16xbf16>, vector<8x16xf32> -> vector<8x16xf32>
    %c0_4 = arith.constant 0 : index
    %c0_5 = arith.constant 0 : index
    %c0_6 = arith.constant 0 : index
    %4 = vector.load %arg4[%c0_4, %c0_5, %c0_6] : memref<2x1x16xf32, #tpu.memory_space<vmem>>, vector<1x1x16xf32>
    %5 = vector.shape_cast %4 : vector<1x1x16xf32> to vector<1x16xf32>
    %6 = vector.broadcast %5 : vector<1x16xf32> to vector<8x16xf32>
    %7 = arith.addf %3, %6 : vector<8x16xf32>
    %8 = arith.negf %7 : vector<8x16xf32>
    %9 = math.exp %8 : vector<8x16xf32>
    %cst_7 = arith.constant 1.000000e+00 : f32
    %10 = vector.broadcast %cst_7 : f32 to vector<8x16xf32>
    %11 = arith.addf %10, %9 : vector<8x16xf32>
    %12 = arith.divf %10, %11 : vector<8x16xf32>
    %13 = arith.truncf %12 : vector<8x16xf32> to vector<8x16xbf16>
    %c0_8 = arith.constant 0 : index
    %c0_9 = arith.constant 0 : index
    %c0_10 = arith.constant 0 : index
    %14 = vector.load %arg5[%c0_8, %c0_9, %c0_10] : memref<2x16x32xbf16, #tpu.memory_space<vmem>>, vector<1x16x32xbf16>
    %15 = vector.shape_cast %14 : vector<1x16x32xbf16> to vector<16x32xbf16>
    %cst_11 = arith.constant dense<0.000000e+00> : vector<8x32xf32>
    %16 = tpu.matmul %13, %15, %cst_11 {dimension_numbers = #tpu.dot_dimension_numbers<[1], [0], [0], [1], [0, 0, 1, 1], [], []>} : vector<8x16xbf16>, vector<16x32xbf16>, vector<8x32xf32> -> vector<8x32xf32>
    %c0_12 = arith.constant 0 : index
    %c0_13 = arith.constant 0 : index
    %c0_14 = arith.constant 0 : index
    %17 = vector.load %arg6[%c0_12, %c0_13, %c0_14] : memref<2x1x32xf32, #tpu.memory_space<vmem>>, vector<1x1x32xf32>
    %18 = vector.shape_cast %17 : vector<1x1x32xf32> to vector<1x32xf32>
    %19 = vector.broadcast %18 : vector<1x32xf32> to vector<8x32xf32>
    %20 = arith.addf %16, %19 : vector<8x32xf32>
    %21 = arith.negf %20 : vector<8x32xf32>
    %22 = math.exp %21 : vector<8x32xf32>
    %cst_15 = arith.constant 1.000000e+00 : f32
    %23 = vector.broadcast %cst_15 : f32 to vector<8x32xf32>
    %24 = arith.addf %23, %22 : vector<8x32xf32>
    %25 = arith.divf %23, %24 : vector<8x32xf32>
    %26 = arith.truncf %25 : vector<8x32xf32> to vector<8x32xbf16>
    %c0_16 = arith.constant 0 : index
    %c0_17 = arith.constant 0 : index
    %27 = vector.load %arg2[%c0_16, %c0_17] : memref<8x32xbf16, #tpu.memory_space<vmem>>, vector<8x32xbf16>
    %c1 = arith.constant 1 : index
    %c0_18 = arith.constant 0 : index
    %c0_19 = arith.constant 0 : index
    %28 = vector.load %arg3[%c1, %c0_18, %c0_19] : memref<2x32x16xbf16, #tpu.memory_space<vmem>>, vector<1x32x16xbf16>
    %29 = vector.shape_cast %28 : vector<1x32x16xbf16> to vector<32x16xbf16>
    %cst_20 = arith.constant dense<0.000000e+00> : vector<8x16xf32>
    %30 = tpu.matmul %27, %29, %cst_20 {dimension_numbers = #tpu.dot_dimension_numbers<[1], [0], [0], [1], [0, 0, 1, 1], [], []>} : vector<8x32xbf16>, vector<32x16xbf16>, vector<8x16xf32> -> vector<8x16xf32>
    %c1_21 = arith.constant 1 : index
    %c0_22 = arith.constant 0 : index
    %c0_23 = arith.constant 0 : index
    %31 = vector.load %arg4[%c1_21, %c0_22, %c0_23] : memref<2x1x16xf32, #tpu.memory_space<vmem>>, vector<1x1x16xf32>
    %32 = vector.shape_cast %31 : vector<1x1x16xf32> to vector<1x16xf32>
    %33 = vector.broadcast %32 : vector<1x16xf32> to vector<8x16xf32>
    %34 = arith.addf %30, %33 : vector<8x16xf32>
    %35 = arith.negf %34 : vector<8x16xf32>
    %36 = math.exp %35 : vector<8x16xf32>
    %cst_24 = arith.constant 1.000000e+00 : f32
    %37 = vector.broadcast %cst_24 : f32 to vector<8x16xf32>
    %38 = arith.addf %37, %36 : vector<8x16xf32>
    %39 = arith.divf %37, %38 : vector<8x16xf32>
    %40 = arith.truncf %39 : vector<8x16xf32> to vector<8x16xbf16>
    %c1_25 = arith.constant 1 : index
    %c0_26 = arith.constant 0 : index
    %c0_27 = arith.constant 0 : index
    %41 = vector.load %arg5[%c1_25, %c0_26, %c0_27] : memref<2x16x32xbf16, #tpu.memory_space<vmem>>, vector<1x16x32xbf16>
    %42 = vector.shape_cast %41 : vector<1x16x32xbf16> to vector<16x32xbf16>
    %cst_28 = arith.constant dense<0.000000e+00> : vector<8x32xf32>
    %43 = tpu.matmul %40, %42, %cst_28 {dimension_numbers = #tpu.dot_dimension_numbers<[1], [0], [0], [1], [0, 0, 1, 1], [], []>} : vector<8x16xbf16>, vector<16x32xbf16>, vector<8x32xf32> -> vector<8x32xf32>
    %c1_29 = arith.constant 1 : index
    %c0_30 = arith.constant 0 : index
    %c0_31 = arith.constant 0 : index
    %44 = vector.load %arg6[%c1_29, %c0_30, %c0_31] : memref<2x1x32xf32, #tpu.memory_space<vmem>>, vector<1x1x32xf32>
    %45 = vector.shape_cast %44 : vector<1x1x32xf32> to vector<1x32xf32>
    %46 = vector.broadcast %45 : vector<1x32xf32> to vector<8x32xf32>
    %47 = arith.addf %43, %46 : vector<8x32xf32>
    %48 = arith.negf %47 : vector<8x32xf32>
    %49 = math.exp %48 : vector<8x32xf32>
    %cst_32 = arith.constant 1.000000e+00 : f32
    %50 = vector.broadcast %cst_32 : f32 to vector<8x32xf32>
    %51 = arith.addf %50, %49 : vector<8x32xf32>
    %52 = arith.divf %50, %51 : vector<8x32xf32>
    %53 = arith.truncf %52 : vector<8x32xf32> to vector<8x32xbf16>
    %c0_33 = arith.constant 0 : index
    %c0_34 = arith.constant 0 : index
    %54 = vector.load %arg9[%c0_33, %c0_34] : memref<32x2xbf16, #tpu.memory_space<vmem>>, vector<32x2xbf16>
    %cst_35 = arith.constant dense<0.000000e+00> : vector<8x2xf32>
    %55 = tpu.matmul %26, %54, %cst_35 {dimension_numbers = #tpu.dot_dimension_numbers<[1], [0], [0], [1], [0, 0, 1, 1], [], []>} : vector<8x32xbf16>, vector<32x2xbf16>, vector<8x2xf32> -> vector<8x2xf32>
    %c0_36 = arith.constant 0 : index
    %c0_37 = arith.constant 0 : index
    %56 = vector.load %arg10[%c0_36, %c0_37] : memref<1x2xf32, #tpu.memory_space<vmem>>, vector<1x2xf32>
    %57 = vector.broadcast %56 : vector<1x2xf32> to vector<8x2xf32>
    %58 = arith.addf %55, %57 : vector<8x2xf32>
    %c0_38 = arith.constant 0 : index
    %c0_39 = arith.constant 0 : index
    %c0_40 = arith.constant 0 : index
    %59 = vector.load %arg7[%c0_38, %c0_39, %c0_40] : memref<2x32x32xbf16, #tpu.memory_space<vmem>>, vector<1x32x32xbf16>
    %60 = vector.shape_cast %59 : vector<1x32x32xbf16> to vector<32x32xbf16>
    %cst_41 = arith.constant dense<0.000000e+00> : vector<8x32xf32>
    %61 = tpu.matmul %26, %60, %cst_41 {dimension_numbers = #tpu.dot_dimension_numbers<[1], [0], [0], [1], [0, 0, 1, 1], [], []>} : vector<8x32xbf16>, vector<32x32xbf16>, vector<8x32xf32> -> vector<8x32xf32>
    %c0_42 = arith.constant 0 : index
    %c0_43 = arith.constant 0 : index
    %c0_44 = arith.constant 0 : index
    %62 = vector.load %arg8[%c0_42, %c0_43, %c0_44] : memref<2x1x32xf32, #tpu.memory_space<vmem>>, vector<1x1x32xf32>
    %63 = vector.shape_cast %62 : vector<1x1x32xf32> to vector<1x32xf32>
    %64 = vector.broadcast %63 : vector<1x32xf32> to vector<8x32xf32>
    %65 = arith.addf %61, %64 : vector<8x32xf32>
    %66 = arith.truncf %65 : vector<8x32xf32> to vector<8x32xbf16>
    %c1_45 = arith.constant 1 : index
    %c0_46 = arith.constant 0 : index
    %c0_47 = arith.constant 0 : index
    %67 = vector.load %arg7[%c1_45, %c0_46, %c0_47] : memref<2x32x32xbf16, #tpu.memory_space<vmem>>, vector<1x32x32xbf16>
    %68 = vector.shape_cast %67 : vector<1x32x32xbf16> to vector<32x32xbf16>
    %cst_48 = arith.constant dense<0.000000e+00> : vector<8x32xf32>
    %69 = tpu.matmul %26, %68, %cst_48 {dimension_numbers = #tpu.dot_dimension_numbers<[1], [0], [0], [1], [0, 0, 1, 1], [], []>} : vector<8x32xbf16>, vector<32x32xbf16>, vector<8x32xf32> -> vector<8x32xf32>
    %c1_49 = arith.constant 1 : index
    %c0_50 = arith.constant 0 : index
    %c0_51 = arith.constant 0 : index
    %70 = vector.load %arg8[%c1_49, %c0_50, %c0_51] : memref<2x1x32xf32, #tpu.memory_space<vmem>>, vector<1x1x32xf32>
    %71 = vector.shape_cast %70 : vector<1x1x32xf32> to vector<1x32xf32>
    %72 = vector.broadcast %71 : vector<1x32xf32> to vector<8x32xf32>
    %73 = arith.addf %69, %72 : vector<8x32xf32>
    %74 = arith.truncf %73 : vector<8x32xf32> to vector<8x32xbf16>
    %75 = tpu.transpose %53, [1, 0] : vector<8x32xbf16> -> vector<32x8xbf16>
    %cst_52 = arith.constant dense<0.000000e+00> : vector<8x8xf32>
    %76 = tpu.matmul %66, %75, %cst_52 {dimension_numbers = #tpu.dot_dimension_numbers<[1], [0], [0], [1], [0, 0, 1, 1], [], []>} : vector<8x32xbf16>, vector<32x8xbf16>, vector<8x8xf32> -> vector<8x8xf32>
    %77 = vector.extract_strided_slice %58 {offsets = [0, 0], sizes = [8, 1], strides = [1, 1]} : vector<8x2xf32> to vector<8x1xf32>
    %78 = vector.broadcast %77 : vector<8x1xf32> to vector<8x8xf32>
    %79 = arith.addf %76, %78 : vector<8x8xf32>
    %c0_53 = arith.constant 0 : index
    %c0_54 = arith.constant 0 : index
    %c0_55 = arith.constant 0 : index
    %c0_56 = arith.constant 0 : index
    %80 = vector.load %arg11[%c0_53, %c0_54, %c0_55, %c0_56] : memref<1x2x8x8xf32, #tpu.memory_space<vmem>>, vector<1x1x8x8xf32>
    %81 = vector.shape_cast %80 : vector<1x1x8x8xf32> to vector<8x8xf32>
    %82 = vector.shape_cast %79 : vector<8x8xf32> to vector<1x1x8x8xf32>
    tpu.vector_store %arg11[%c0_53, %c0_54, %c0_55, %c0_56], %82 {strides = array<i32>} : memref<1x2x8x8xf32, #tpu.memory_space<vmem>>, vector<1x1x8x8xf32>,
    %cst_57 = arith.constant dense<0.000000e+00> : vector<8x8xf32>
    %83 = tpu.matmul %74, %75, %cst_57 {dimension_numbers = #tpu.dot_dimension_numbers<[1], [0], [0], [1], [0, 0, 1, 1], [], []>} : vector<8x32xbf16>, vector<32x8xbf16>, vector<8x8xf32> -> vector<8x8xf32>
    %84 = vector.extract_strided_slice %58 {offsets = [0, 1], sizes = [8, 1], strides = [1, 1]} : vector<8x2xf32> to vector<8x1xf32>
    %85 = vector.broadcast %84 : vector<8x1xf32> to vector<8x8xf32>
    %86 = arith.addf %83, %85 : vector<8x8xf32>
    %c0_58 = arith.constant 0 : index
    %c1_59 = arith.constant 1 : index
    %c0_60 = arith.constant 0 : index
    %c0_61 = arith.constant 0 : index
    %87 = vector.load %arg11[%c0_58, %c1_59, %c0_60, %c0_61] : memref<1x2x8x8xf32, #tpu.memory_space<vmem>>, vector<1x1x8x8xf32>
    %88 = vector.shape_cast %87 : vector<1x1x8x8xf32> to vector<8x8xf32>
    %89 = vector.shape_cast %86 : vector<8x8xf32> to vector<1x1x8x8xf32>
    tpu.vector_store %arg11[%c0_58, %c1_59, %c0_60, %c0_61], %89 {strides = array<i32>} : memref<1x2x8x8xf32, #tpu.memory_space<vmem>>, vector<1x1x8x8xf32>,
    return
  }
  func.func @transform_0(%arg0: i32) -> (i32, i32) {
    %c0_i32 = arith.constant 0 : i32
    %c0_i32_0 = arith.constant 0 : i32
    return %arg0, %c0_i32 : i32, i32
  }
  func.func @transform_1(%arg0: i32) -> (i32, i32) {
    %c0_i32 = arith.constant 0 : i32
    %c0_i32_0 = arith.constant 0 : i32
    return %arg0, %c0_i32 : i32, i32
  }
  func.func @transform_2(%arg0: i32) -> (i32, i32, i32) {
    %c0_i32 = arith.constant 0 : i32
    %c0_i32_0 = arith.constant 0 : i32
    %c0_i32_1 = arith.constant 0 : i32
    %c0_i32_2 = arith.constant 0 : i32
    return %c0_i32, %c0_i32_0, %c0_i32_1 : i32, i32, i32
  }
  func.func @transform_3(%arg0: i32) -> (i32, i32, i32) {
    %c0_i32 = arith.constant 0 : i32
    %c0_i32_0 = arith.constant 0 : i32
    %c0_i32_1 = arith.constant 0 : i32
    %c0_i32_2 = arith.constant 0 : i32
    return %c0_i32, %c0_i32_0, %c0_i32_1 : i32, i32, i32
  }
  func.func @transform_4(%arg0: i32) -> (i32, i32, i32) {
    %c0_i32 = arith.constant 0 : i32
    %c0_i32_0 = arith.constant 0 : i32
    %c0_i32_1 = arith.constant 0 : i32
    %c0_i32_2 = arith.constant 0 : i32
    return %c0_i32, %c0_i32_0, %c0_i32_1 : i32, i32, i32
  }
  func.func @transform_5(%arg0: i32) -> (i32, i32, i32) {
    %c0_i32 = arith.constant 0 : i32
    %c0_i32_0 = arith.constant 0 : i32
    %c0_i32_1 = arith.constant 0 : i32
    %c0_i32_2 = arith.constant 0 : i32
    return %c0_i32, %c0_i32_0, %c0_i32_1 : i32, i32, i32
  }
  func.func @transform_6(%arg0: i32) -> (i32, i32, i32) {
    %c0_i32 = arith.constant 0 : i32
    %c0_i32_0 = arith.constant 0 : i32
    %c0_i32_1 = arith.constant 0 : i32
    %c0_i32_2 = arith.constant 0 : i32
    return %c0_i32, %c0_i32_0, %c0_i32_1 : i32, i32, i32
  }
  func.func @transform_7(%arg0: i32) -> (i32, i32, i32) {
    %c0_i32 = arith.constant 0 : i32
    %c0_i32_0 = arith.constant 0 : i32
    %c0_i32_1 = arith.constant 0 : i32
    %c0_i32_2 = arith.constant 0 : i32
    return %c0_i32, %c0_i32_0, %c0_i32_1 : i32, i32, i32
  }
  func.func @transform_8(%arg0: i32) -> (i32, i32) {
    %c0_i32 = arith.constant 0 : i32
    %c0_i32_0 = arith.constant 0 : i32
    %c0_i32_1 = arith.constant 0 : i32
    return %c0_i32, %c0_i32_0 : i32, i32
  }
  func.func @transform_9(%arg0: i32) -> (i32, i32) {
    %c0_i32 = arith.constant 0 : i32
    %c0_i32_0 = arith.constant 0 : i32
    %c0_i32_1 = arith.constant 0 : i32
    return %c0_i32, %c0_i32_0 : i32, i32
  }
  func.func @transform_10(%arg0: i32) -> (i32, i32, i32, i32) {
    %c0_i32 = arith.constant 0 : i32
    %c0_i32_0 = arith.constant 0 : i32
    %c0_i32_1 = arith.constant 0 : i32
    %c0_i32_2 = arith.constant 0 : i32
    return %arg0, %c0_i32, %c0_i32_0, %c0_i32_1 : i32, i32, i32, i32
  }
}

</mosaic_0001>

<llo_original>
// kernel: tpu_custom_call.1
$region0: #{tpu_custom_call.1}
  #allocation0 [shape = 'u32[]', space=smem, size = 0x4, offset = 0x4, fixed_abs, tag = 'smem constant byte address 0x4 - core index']
  #allocation1 [shape = 'u32[144,128]{1,0:T(1,128)}', space=vmem, size = 0x12000, scoped, tag = 'internal scratch']
  %s0 = inlined_call_operand.vmem [shape: bf16[16,32], index: 0, kind: input, shape index: {}]
  %s1 = inlined_call_operand.hbm [shape: bf16[16,32], index: 1, kind: input, shape index: {}]
  %s2 = inlined_call_operand.vmem [shape: bf16[2,32,16], index: 2, kind: input, shape index: {}]
  %s3 = inlined_call_operand.vmem [shape: f32[2,1,16], index: 3, kind: input, shape index: {}]
  %s4 = inlined_call_operand.vmem [shape: bf16[2,16,32], index: 4, kind: input, shape index: {}]
  %s5 = inlined_call_operand.vmem [shape: f32[2,1,32], index: 5, kind: input, shape index: {}]
  %s6 = inlined_call_operand.vmem [shape: bf16[2,32,32], index: 6, kind: input, shape index: {}]
  %s7 = inlined_call_operand.vmem [shape: f32[2,1,32], index: 7, kind: input, shape index: {}]
  %s8 = inlined_call_operand.vmem [shape: bf16[32,2], index: 8, kind: input, shape index: {}]
  %s9 = inlined_call_operand.vmem [shape: f32[1,2], index: 9, kind: input, shape index: {}]
  %s10 = inlined_call_operand.hbm [shape: f32[2,2,8,8], index: 10, kind: output, shape index: {}]
  %s11 = sld [smem:[#allocation0]]
  $region77: #{tpu_custom_call.1} parent=0
    _
  %s13 = ssub.s32 1, %s11
  %s14 = scalar_select 0, %s13, %s11
  $region1: #{tpu_custom_call.1} parent=0
    #allocation2 [shape = 'u8[4096]{0}', space=vmem, size = 0x1000, scoped, tag = 'input window, operand 1']
    #allocation3 [shape = 's32[2]{0}', space=sflag, size = 0x8, scoped, tag = 'scoped memory for tpu_custom_call.1']
    #allocation4 [shape = 's32[2]{0}', space=sflag, size = 0x8, scoped, tag = 'scoped memory for tpu_custom_call.1']
    #allocation5 [shape = 'u8[16384]{0}', space=vmem, size = 0x4000, scoped, tag = 'output window, operand 0']
    %15 = vsyncpa [#allocation3], 0
    %s16 = scalar_lea.sflag [#allocation3], 1
    %17 = vsyncpa %s16, 0
    %18 = vsyncpa [#allocation4], 0
    %s19 = scalar_lea.sflag [#allocation4], 1
    %20 = vsyncpa %s19, 0
    loop: start=0, step=1, limit=4
    $region2: #{tpu_custom_call.1} parent=1 // loop_pre_header
      _
    $region3: #{tpu_custom_call.1} parent=1 // loop_header
      %s22 = sphi 0, %s26
      %p23 = scmp.ge.s32.totalorder %s22, 4
      %s32 = sphi 0, %s34
      %s35 = sphi 0, %s32
      %s36 = sphi 0, %s35
      %s52 = sphi 0, %s36
      %s58 = sphi 0, %s60
      %s61 = sphi 0, %s58
      %s62 = sphi 0, %s61
      %s78 = sphi 0, %s62
      %s82 = sphi 0, %s82
      %s84 = sphi 0, %s82
      %s85 = sphi 0, %s84
      %s99 = sphi 0, %s85
      %s103 = sphi 0, %s103
      %s105 = sphi 0, %s103
      %s106 = sphi 0, %s105
      %s120 = sphi 0, %s106
      %s124 = sphi 0, %s124
      %s126 = sphi 0, %s124
      %s127 = sphi 0, %s126
      %s141 = sphi 0, %s127
      %s145 = sphi 0, %s145
      %s147 = sphi 0, %s145
      %s148 = sphi 0, %s147
      %s162 = sphi 0, %s148
      %s166 = sphi 0, %s166
      %s168 = sphi 0, %s166
      %s169 = sphi 0, %s168
      %s183 = sphi 0, %s169
      %s187 = sphi 0, %s187
      %s189 = sphi 0, %s187
      %s190 = sphi 0, %s189
      %s204 = sphi 0, %s190
      %s208 = sphi 0, %s208
      %s210 = sphi 0, %s208
      %s211 = sphi 0, %s210
      %s225 = sphi 0, %s211
      %s229 = sphi 0, %s229
      %s231 = sphi 0, %s229
      %s232 = sphi 0, %s231
      %s246 = sphi 0, %s232
      %s252 = sphi 0, %s254
      %s255 = sphi 0, %s252
      %s256 = sphi 0, %s255
      %s272 = sphi 0, %s256
    $region4: #{tpu_custom_call.1} parent=1 // loop_header_branch
      %25 = sbr.rel (%p23) target = $region8
    $region5: #{tpu_custom_call.1} parent=1 // loop_body
      %s27 = ssub.s32 %s22, 1
      %s28 = ssub.s32 %s22, 2
      %s29 = sadd.s32 %s22, 1
      %s30 = ssub.s32 %s22, %s29
      %p31 = scmp.eq.s32.totalorder %s30, 0
      %s33 = sadd.s32 %s32, 1
      %s34 = scalar_select %p31, %s32, %s33
      %p37 = pneg %p31
      %p38 = scmp.eq.s32.totalorder %s22, 1
      %p39 = por %p37, %p38
      %p40 = scmp.ne.s32.totalorder %s32, %s35
      %p41 = scmp.eq.s32.totalorder %s22, 0
      %p42 = por %p40, %p41
      %p43 = scmp.ne.s32.totalorder %s32, %s35
      %p44 = scmp.eq.s32.totalorder %s27, 1
      %p45 = por %p43, %p44
      %p46 = scmp.ne.s32.totalorder %s35, %s36
      %p47 = scmp.eq.s32.totalorder %s27, 0
      %p48 = por %p46, %p47
      %p49 = scmp.ne.s32.totalorder %s35, %s36
      %p50 = scmp.eq.s32.totalorder %s28, 1
      %p51 = por %p49, %p50
      %p53 = scmp.ne.s32.totalorder %s36, %s52
      %p54 = scmp.eq.s32.totalorder %s28, 0
      %p55 = por %p53, %p54
      %s56 = ssub.s32 %s22, %s29
      %p57 = scmp.eq.s32.totalorder %s56, 0
      %s59 = sadd.s32 %s58, 1
      %s60 = scalar_select %p57, %s58, %s59
      %p63 = pneg %p57
      %p64 = scmp.eq.s32.totalorder %s22, 1
      %p65 = por %p63, %p64
      %p66 = scmp.ne.s32.totalorder %s58, %s61
      %p67 = scmp.eq.s32.totalorder %s22, 0
      %p68 = por %p66, %p67
      %p69 = scmp.ne.s32.totalorder %s58, %s61
      %p70 = scmp.eq.s32.totalorder %s27, 1
      %p71 = por %p69, %p70
      %p72 = scmp.ne.s32.totalorder %s61, %s62
      %p73 = scmp.eq.s32.totalorder %s27, 0
      %p74 = por %p72, %p73
      %p75 = scmp.ne.s32.totalorder %s61, %s62
      %p76 = scmp.eq.s32.totalorder %s28, 1
      %p77 = por %p75, %p76
      %p79 = scmp.ne.s32.totalorder %s62, %s78
      %p80 = scmp.eq.s32.totalorder %s28, 0
      %p81 = por %p79, %p80
      %s83 = sadd.s32 %s82, 1
      %p86 = scmp.eq.s32.totalorder %s22, 1
      %p87 = scmp.ne.s32.totalorder %s82, %s84
      %p88 = scmp.eq.s32.totalorder %s22, 0
      %p89 = por %p87, %p88
      %p90 = scmp.ne.s32.totalorder %s82, %s84
      %p91 = scmp.eq.s32.totalorder %s27, 1
      %p92 = por %p90, %p91
      %p93 = scmp.ne.s32.totalorder %s84, %s85
      %p94 = scmp.eq.s32.totalorder %s27, 0
      %p95 = por %p93, %p94
      %p96 = scmp.ne.s32.totalorder %s84, %s85
      %p97 = scmp.eq.s32.totalorder %s28, 1
      %p98 = por %p96, %p97
      %p100 = scmp.ne.s32.totalorder %s85, %s99
      %p101 = scmp.eq.s32.totalorder %s28, 0
      %p102 = por %p100, %p101
      %s104 = sadd.s32 %s103, 1
      %p107 = scmp.eq.s32.totalorder %s22, 1
      %p108 = scmp.ne.s32.totalorder %s103, %s105
      %p109 = scmp.eq.s32.totalorder %s22, 0
      %p110 = por %p108, %p109
      %p111 = scmp.ne.s32.totalorder %s103, %s105
      %p112 = scmp.eq.s32.totalorder %s27, 1
      %p113 = por %p111, %p112
      %p114 = scmp.ne.s32.totalorder %s105, %s106
      %p115 = scmp.eq.s32.totalorder %s27, 0
      %p116 = por %p114, %p115
      %p117 = scmp.ne.s32.totalorder %s105, %s106
      %p118 = scmp.eq.s32.totalorder %s28, 1
      %p119 = por %p117, %p118
      %p121 = scmp.ne.s32.totalorder %s106, %s120
      %p122 = scmp.eq.s32.totalorder %s28, 0
      %p123 = por %p121, %p122
      %s125 = sadd.s32 %s124, 1
      %p128 = scmp.eq.s32.totalorder %s22, 1
      %p129 = scmp.ne.s32.totalorder %s124, %s126
      %p130 = scmp.eq.s32.totalorder %s22, 0
      %p131 = por %p129, %p130
      %p132 = scmp.ne.s32.totalorder %s124, %s126
      %p133 = scmp.eq.s32.totalorder %s27, 1
      %p134 = por %p132, %p133
      %p135 = scmp.ne.s32.totalorder %s126, %s127
      %p136 = scmp.eq.s32.totalorder %s27, 0
      %p137 = por %p135, %p136
      %p138 = scmp.ne.s32.totalorder %s126, %s127
      %p139 = scmp.eq.s32.totalorder %s28, 1
      %p140 = por %p138, %p139
      %p142 = scmp.ne.s32.totalorder %s127, %s141
      %p143 = scmp.eq.s32.totalorder %s28, 0
      %p144 = por %p142, %p143
      %s146 = sadd.s32 %s145, 1
      %p149 = scmp.eq.s32.totalorder %s22, 1
      %p150 = scmp.ne.s32.totalorder %s145, %s147
      %p151 = scmp.eq.s32.totalorder %s22, 0
      %p152 = por %p150, %p151
      %p153 = scmp.ne.s32.totalorder %s145, %s147
      %p154 = scmp.eq.s32.totalorder %s27, 1
      %p155 = por %p153, %p154
      %p156 = scmp.ne.s32.totalorder %s147, %s148
      %p157 = scmp.eq.s32.totalorder %s27, 0
      %p158 = por %p156, %p157
      %p159 = scmp.ne.s32.totalorder %s147, %s148
      %p160 = scmp.eq.s32.totalorder %s28, 1
      %p161 = por %p159, %p160
      %p163 = scmp.ne.s32.totalorder %s148, %s162
      %p164 = scmp.eq.s32.totalorder %s28, 0
      %p165 = por %p163, %p164
      %s167 = sadd.s32 %s166, 1
      %p170 = scmp.eq.s32.totalorder %s22, 1
      %p171 = scmp.ne.s32.totalorder %s166, %s168
      %p172 = scmp.eq.s32.totalorder %s22, 0
      %p173 = por %p171, %p172
      %p174 = scmp.ne.s32.totalorder %s166, %s168
      %p175 = scmp.eq.s32.totalorder %s27, 1
      %p176 = por %p174, %p175
      %p177 = scmp.ne.s32.totalorder %s168, %s169
      %p178 = scmp.eq.s32.totalorder %s27, 0
      %p179 = por %p177, %p178
      %p180 = scmp.ne.s32.totalorder %s168, %s169
      %p181 = scmp.eq.s32.totalorder %s28, 1
      %p182 = por %p180, %p181
      %p184 = scmp.ne.s32.totalorder %s169, %s183
      %p185 = scmp.eq.s32.totalorder %s28, 0
      %p186 = por %p184, %p185
      %s188 = sadd.s32 %s187, 1
      %p191 = scmp.eq.s32.totalorder %s22, 1
      %p192 = scmp.ne.s32.totalorder %s187, %s189
      %p193 = scmp.eq.s32.totalorder %s22, 0
      %p194 = por %p192, %p193
      %p195 = scmp.ne.s32.totalorder %s187, %s189
      %p196 = scmp.eq.s32.totalorder %s27, 1
      %p197 = por %p195, %p196
      %p198 = scmp.ne.s32.totalorder %s189, %s190
      %p199 = scmp.eq.s32.totalorder %s27, 0
      %p200 = por %p198, %p199
      %p201 = scmp.ne.s32.totalorder %s189, %s190
      %p202 = scmp.eq.s32.totalorder %s28, 1
      %p203 = por %p201, %p202
      %p205 = scmp.ne.s32.totalorder %s190, %s204
      %p206 = scmp.eq.s32.totalorder %s28, 0
      %p207 = por %p205, %p206
      %s209 = sadd.s32 %s208, 1
      %p212 = scmp.eq.s32.totalorder %s22, 1
      %p213 = scmp.ne.s32.totalorder %s208, %s210
      %p214 = scmp.eq.s32.totalorder %s22, 0
      %p215 = por %p213, %p214
      %p216 = scmp.ne.s32.totalorder %s208, %s210
      %p217 = scmp.eq.s32.totalorder %s27, 1
      %p218 = por %p216, %p217
      %p219 = scmp.ne.s32.totalorder %s210, %s211
      %p220 = scmp.eq.s32.totalorder %s27, 0
      %p221 = por %p219, %p220
      %p222 = scmp.ne.s32.totalorder %s210, %s211
      %p223 = scmp.eq.s32.totalorder %s28, 1
      %p224 = por %p222, %p223
      %p226 = scmp.ne.s32.totalorder %s211, %s225
      %p227 = scmp.eq.s32.totalorder %s28, 0
      %p228 = por %p226, %p227
      %s230 = sadd.s32 %s229, 1
      %p233 = scmp.eq.s32.totalorder %s22, 1
      %p234 = scmp.ne.s32.totalorder %s229, %s231
      %p235 = scmp.eq.s32.totalorder %s22, 0
      %p236 = por %p234, %p235
      %p237 = scmp.ne.s32.totalorder %s229, %s231
      %p238 = scmp.eq.s32.totalorder %s27, 1
      %p239 = por %p237, %p238
      %p240 = scmp.ne.s32.totalorder %s231, %s232
      %p241 = scmp.eq.s32.totalorder %s27, 0
      %p242 = por %p240, %p241
      %p243 = scmp.ne.s32.totalorder %s231, %s232
      %p244 = scmp.eq.s32.totalorder %s28, 1
      %p245 = por %p243, %p244
      %p247 = scmp.ne.s32.totalorder %s232, %s246
      %p248 = scmp.eq.s32.totalorder %s28, 0
      %p249 = por %p247, %p248
      %s250 = ssub.s32 %s22, %s29
      %p251 = scmp.eq.s32.totalorder %s250, 0
      %s253 = sadd.s32 %s252, 1
      %s254 = scalar_select %p251, %s252, %s253
      %p257 = pneg %p251
      %p258 = scmp.eq.s32.totalorder %s22, 1
      %p259 = por %p257, %p258
      %p260 = scmp.ne.s32.totalorder %s252, %s255
      %p261 = scmp.eq.s32.totalorder %s22, 0
      %p262 = por %p260, %p261
      %p263 = scmp.ne.s32.totalorder %s252, %s255
      %p264 = scmp.eq.s32.totalorder %s27, 1
      %p265 = por %p263, %p264
      %p266 = scmp.ne.s32.totalorder %s255, %s256
      %p267 = scmp.eq.s32.totalorder %s27, 0
      %p268 = por %p266, %p267
      %p269 = scmp.ne.s32.totalorder %s255, %s256
      %p270 = scmp.eq.s32.totalorder %s28, 1
      %p271 = por %p269, %p270
      %p273 = scmp.ne.s32.totalorder %s256, %s272
      %p274 = scmp.eq.s32.totalorder %s28, 0
      %p275 = por %p273, %p274
      %p276 = scmp.le.s32.totalorder 1, %s22
      %p277 = scmp.lt.s32.totalorder %s22, 3
      %p278 = pnand %p276, %p277
      %p279 = pneg %p278
      // Predicated region
      $region9: #{tpu_custom_call.1} parent=5 // pred_check
        _
      $region10: #{tpu_custom_call.1} parent=5 // pred_check_branch
        %281 = sbr.rel (%p278) target = $region12
      $region11: #{tpu_custom_call.1} parent=5 // pred_region
        %s282 = ssub.s32 %s22, 1
        // Predicated region
        $region13: #{tpu_custom_call.1} parent=11 // pred_check
          %p283 = pneg %p95
        $region14: #{tpu_custom_call.1} parent=11 // pred_check_branch
          %285 = sbr.rel (%p283) target = $region16
        $region15: #{tpu_custom_call.1} parent=11 // pred_region
          _
        $region16: #{tpu_custom_call.1} parent=11 // pred_fallthru
          _
        // Predicated region
        $region17: #{tpu_custom_call.1} parent=11 // pred_check
          %p286 = pneg %p116
        $region18: #{tpu_custom_call.1} parent=11 // pred_check_branch
          %288 = sbr.rel (%p286) target = $region20
        $region19: #{tpu_custom_call.1} parent=11 // pred_region
          _
        $region20: #{tpu_custom_call.1} parent=11 // pred_fallthru
          _
        // Predicated region
        $region21: #{tpu_custom_call.1} parent=11 // pred_check
          %p289 = pneg %p137
        $region22: #{tpu_custom_call.1} parent=11 // pred_check_branch
          %291 = sbr.rel (%p289) target = $region24
        $region23: #{tpu_custom_call.1} parent=11 // pred_region
          _
        $region24: #{tpu_custom_call.1} parent=11 // pred_fallthru
          _
        // Predicated region
        $region25: #{tpu_custom_call.1} parent=11 // pred_check
          %p292 = pneg %p158
        $region26: #{tpu_custom_call.1} parent=11 // pred_check_branch
          %294 = sbr.rel (%p292) target = $region28
        $region27: #{tpu_custom_call.1} parent=11 // pred_region
          _
        $region28: #{tpu_custom_call.1} parent=11 // pred_fallthru
          _
        // Predicated region
        $region29: #{tpu_custom_call.1} parent=11 // pred_check
          %p295 = pneg %p179
        $region30: #{tpu_custom_call.1} parent=11 // pred_check_branch
          %297 = sbr.rel (%p295) target = $region32
        $region31: #{tpu_custom_call.1} parent=11 // pred_region
          _
        $region32: #{tpu_custom_call.1} parent=11 // pred_fallthru
          _
        // Predicated region
        $region33: #{tpu_custom_call.1} parent=11 // pred_check
          %p298 = pneg %p200
        $region34: #{tpu_custom_call.1} parent=11 // pred_check_branch
          %300 = sbr.rel (%p298) target = $region36
        $region35: #{tpu_custom_call.1} parent=11 // pred_region
          _
        $region36: #{tpu_custom_call.1} parent=11 // pred_fallthru
          _
        // Predicated region
        $region37: #{tpu_custom_call.1} parent=11 // pred_check
          %p301 = pneg %p221
        $region38: #{tpu_custom_call.1} parent=11 // pred_check_branch
          %303 = sbr.rel (%p301) target = $region40
        $region39: #{tpu_custom_call.1} parent=11 // pred_region
          _
        $region40: #{tpu_custom_call.1} parent=11 // pred_fallthru
          _
        // Predicated region
        $region41: #{tpu_custom_call.1} parent=11 // pred_check
          %p304 = pneg %p242
        $region42: #{tpu_custom_call.1} parent=11 // pred_check_branch
          %306 = sbr.rel (%p304) target = $region44
        $region43: #{tpu_custom_call.1} parent=11 // pred_region
          _
        $region44: #{tpu_custom_call.1} parent=11 // pred_fallthru
          _
      $region12: #{tpu_custom_call.1} parent=5 // pred_fallthru
        _
      %p307 = scmp.lt.s32.totalorder %s22, 2
      // Predicated region
      $region45: #{tpu_custom_call.1} parent=5 // pred_check
        %p308 = pneg %p307
      $region46: #{tpu_custom_call.1} parent=5 // pred_check_branch
        %310 = sbr.rel (%p308) target = $region48
      $region47: #{tpu_custom_call.1} parent=5 // pred_region
        // Predicated region
        $region49: #{tpu_custom_call.1} parent=47 // pred_check
          %p311 = pneg %p42
        $region50: #{tpu_custom_call.1} parent=47 // pred_check_branch
          %313 = sbr.rel (%p311) target = $region52
        $region51: #{tpu_custom_call.1} parent=47 // pred_region
          %p314 = scmp.lt.s32.totalorder %s22, 1
          %s315 = scalar_select %p314, %s22, 1
          %s316 = smul.addr %s315, 4
          %s317 = scalar_lea.vmem %s0, %s316
        $region52: #{tpu_custom_call.1} parent=47 // pred_fallthru
          _
        // Predicated region
        $region53: #{tpu_custom_call.1} parent=47 // pred_check
          %p318 = pneg %p68
        $region54: #{tpu_custom_call.1} parent=47 // pred_check_branch
          %320 = sbr.rel (%p318) target = $region56
        $region55: #{tpu_custom_call.1} parent=47 // pred_region
          %s321 = sand.u32 %s58, 1
          %s322 = scalar_lea.sflag [#allocation3], %s321
          %s323 = sand.u32 %s58, 1
          %s324 = smul.addr %s323, 4
          %s325 = scalar_lea.vmem [#allocation2], %s324
          %s327 = ssub.s32 64, 64
          %328 = vsyncadd %s322, %s327
          %s329 = smul.addr %s22, 64
          %s330 = scalar_lea.hbm %s1, %s329
          %s332 = sshll.u32 %s325, 4
          %s333 = int_to_ptr.vmem [resolvable:$true] %s332
          %335 = dma.hbm_to_vmem [thread:$0]  %s330, 64, %s333, %s322
        $region56: #{tpu_custom_call.1} parent=47 // pred_fallthru
          _
      $region48: #{tpu_custom_call.1} parent=5 // pred_fallthru
        _
      %p336 = scmp.le.s32.totalorder 1, %s22
      %p337 = scmp.lt.s32.totalorder %s22, 3
      %p338 = pnand %p336, %p337
      %p339 = pneg %p338
      // Predicated region
      $region57: #{tpu_custom_call.1} parent=5 // pred_check
        _
      $region58: #{tpu_custom_call.1} parent=5 // pred_check_branch
        %341 = sbr.rel (%p338) target = $region60
      $region59: #{tpu_custom_call.1} parent=5 // pred_region
        %s342 = ssub.s32 %s22, 1
        %s343 = sand.u32 %s61, 1
        %s344 = scalar_lea.sflag [#allocation3], %s343
        %s345 = sand.u32 %s61, 1
        %s346 = smul.addr %s345, 4
        %s347 = scalar_lea.vmem [#allocation2], %s346
        // Predicated region
        $region61: #{tpu_custom_call.1} parent=59 // pred_check
          %p348 = pneg %p74
        $region62: #{tpu_custom_call.1} parent=59 // pred_check_branch
          %350 = sbr.rel (%p348) target = $region64
        $region63: #{tpu_custom_call.1} parent=59 // pred_region
          %351 = dma.done %s344, 64
        $region64: #{tpu_custom_call.1} parent=59 // pred_fallthru
          _
        %p352 = scmp.lt.s32.totalorder %s27, 1
        %s353 = scalar_select %p352, %s27, 1
        %s354 = smul.addr %s353, 4
        %s355 = scalar_lea.vmem %s0, %s354
        %p356 = pneg %p48
        %p357 = pneg %p45
        %s358 = sand.u32 %s61, 1
        %s359 = scalar_lea.sflag [#allocation3], %s358
        %s360 = sand.u32 %s61, 1
        %s361 = smul.addr %s360, 4
        %s362 = scalar_lea.vmem [#allocation2], %s361
        %p363 = pneg %p74
        %p364 = pneg %p71
        %p365 = pneg %p95
        %p366 = pneg %p92
        %p367 = pneg %p116
        %p368 = pneg %p113
        %p369 = pneg %p137
        %p370 = pneg %p134
        %p371 = pneg %p158
        %p372 = pneg %p155
        %p373 = pneg %p179
        %p374 = pneg %p176
        %p375 = pneg %p200
        %p376 = pneg %p197
        %p377 = pneg %p221
        %p378 = pneg %p218
        %p379 = pneg %p242
        %p380 = pneg %p239
        %p381 = pneg %p268
        %p382 = pneg %p265
        %s383 = sand.u32 %s255, 1
        %s384 = scalar_lea.sflag [#allocation4], %s383
        %s385 = sand.u32 %s255, 1
        %s386 = smul.addr %s385, 16
        %s387 = scalar_lea.vmem [#allocation5], %s386
        %p388 = scmp.lt.s32.totalorder %s27, 1
        %s389 = scalar_select %p388, %s27, 1
        %s390 = smul.addr %s389, 4
        %s391 = scalar_lea.vmem %s0, %s390
        %v393 = vld [vmem:[%s391] sm:$0xf]
        %v394 = vld [vmem:[%s2] sm:$0xf]
        %v395 = vld [vmem:[%s2 + $0x4] sm:$0xf]
        %v396 = vld [vmem:[%s2 + $0x8] sm:$0xf]
        %v397 = vld [vmem:[%s2 + $0xc] sm:$0xf]
        %v398 = vld [vmem:[%s3] sm:$0x1]
        %v400 = vlaneseq
        %v401 = vshrl.u32 %v400, 7
        %v402 = vsub.s32 0, %v401
        %v403 = vrot.slane %v398, %v402
        %v409 = vunpack.c.l.b16 %v394
        %v410 = vunpack.c.l.b16 %v395
        %v411 = vunpack.c.l.b16 %v396
        %v412 = vunpack.c.l.b16 %v397
        %v413 = vpack.c.b16 %v410, %v409
        %v414 = vpack.c.b16 %v412, %v411
        %vm417 = vcmask 261120
        %v419 = vsel %vm417, %v393, 0
        %421 = vmatprep.subr.bf16.mxu0 0
        %422 = vmatpush1.bf16.msra.mxu0 %v413
        %423 = vmatprep.subr.bf16.mxu0 0
        %424 = vmatpush1.bf16.msra.mxu0 %v414
        %425 = vmatprep.subr.bf16.mxu0 0
        %426 = vmatpush1.bf16.msra.mxu0 0
        %427 = vmatprep.subr.bf16.mxu0 0
        %428 = vmatpush1.bf16.msra.mxu0 0
        %429 = vmatprep.subr.bf16.mxu0 0
        %430 = vmatpush1.bf16.msra.mxu0 0
        %431 = vmatprep.subr.bf16.mxu0 0
        %432 = vmatpush1.bf16.msra.mxu0 0
        %433 = vmatprep.subr.bf16.mxu0 0
        %434 = vmatpush1.bf16.msra.mxu0 0
        %435 = vmatprep.subr.bf16.mxu0 0
        %436 = vmatpush1.bf16.msra.mxu0 0
        %437 = vmatprep.subr.bf16.mxu0 0
        %438 = vmatpush1.bf16.msra.mxu0 0
        %439 = vmatprep.subr.bf16.mxu0 0
        %440 = vmatpush1.bf16.msra.mxu0 0
        %441 = vmatprep.subr.bf16.mxu0 0
        %442 = vmatpush1.bf16.msra.mxu0 0
        %443 = vmatprep.subr.bf16.mxu0 0
        %444 = vmatpush1.bf16.msra.mxu0 0
        %445 = vmatprep.subr.bf16.mxu0 0
        %446 = vmatpush1.bf16.msra.mxu0 0
        %447 = vmatprep.subr.bf16.mxu0 0
        %448 = vmatpush1.bf16.msra.mxu0 0
        %449 = vmatprep.subr.bf16.mxu0 0
        %450 = vmatpush1.bf16.msra.mxu0 0
        %451 = vmatprep.subr.bf16.mxu0 0
        %452 = vmatpush1.bf16.msra.mxu0 0
        %453 = vmatprep.mubr.bf16.mxu0 0
        %454 = vmatmul.mubr.bf16.gmra.mrb[0].mxu0 %v419
        %v455 = vpop.f32.mrb[0].mxu0
        %v456 = vadd.f32 %v403, %v455
        %v457 = vpop.f32.mrb[0].mxu0
        %v458 = vpop.f32.mrb[0].mxu0
        %v459 = vpop.f32.mrb[0].mxu0
        %460 = vdwg.mxu0
        %v461 = vxor.u32 %v456, 2147483648
        %v462 = vmul.f32 %v461, 1.442695
        %v463 = vpow.pop %v462
        %v464 = vadd.f32 %v463, 1.0
        %v465 = vrcp.pop %v464
        %v466 = vmul.f32 1.0, %v465
        %v467 = vpack.c.bf16 %v466, %v466
        %v468 = vld [vmem:[%s4] sm:$0xf]
        %v469 = vld [vmem:[%s4 + $0x4] sm:$0xf]
        %v470 = vld [vmem:[%s5] sm:$0x1]
        %v472 = vlaneseq
        %v473 = vshrl.u32 %v472, 7
        %v474 = vsub.s32 0, %v473
        %v475 = vrot.slane %v470, %v474
        %v479 = vunpack.c.l.b16 %v468
        %v480 = vunpack.c.l.b16 %v469
        %v481 = vpack.c.b16 %v480, %v479
        %vm483 = vcmask 130048
        %v485 = vsel %vm483, %v467, 0
        %487 = vmatprep.subr.bf16.mxu0 0
        %488 = vmatpush1.bf16.msra.mxu0 %v481
        %489 = vmatprep.subr.bf16.mxu0 0
        %490 = vmatpush1.bf16.msra.mxu0 0
        %491 = vmatprep.subr.bf16.mxu0 0
        %492 = vmatpush1.bf16.msra.mxu0 0
        %493 = vmatprep.subr.bf16.mxu0 0
        %494 = vmatpush1.bf16.msra.mxu0 0
        %495 = vmatprep.subr.bf16.mxu0 0
        %496 = vmatpush1.bf16.msra.mxu0 0
        %497 = vmatprep.subr.bf16.mxu0 0
        %498 = vmatpush1.bf16.msra.mxu0 0
        %499 = vmatprep.subr.bf16.mxu0 0
        %500 = vmatpush1.bf16.msra.mxu0 0
        %501 = vmatprep.subr.bf16.mxu0 0
        %502 = vmatpush1.bf16.msra.mxu0 0
        %503 = vmatprep.subr.bf16.mxu0 0
        %504 = vmatpush1.bf16.msra.mxu0 0
        %505 = vmatprep.subr.bf16.mxu0 0
        %506 = vmatpush1.bf16.msra.mxu0 0
        %507 = vmatprep.subr.bf16.mxu0 0
        %508 = vmatpush1.bf16.msra.mxu0 0
        %509 = vmatprep.subr.bf16.mxu0 0
        %510 = vmatpush1.bf16.msra.mxu0 0
        %511 = vmatprep.subr.bf16.mxu0 0
        %512 = vmatpush1.bf16.msra.mxu0 0
        %513 = vmatprep.subr.bf16.mxu0 0
        %514 = vmatpush1.bf16.msra.mxu0 0
        %515 = vmatprep.subr.bf16.mxu0 0
        %516 = vmatpush1.bf16.msra.mxu0 0
        %517 = vmatprep.subr.bf16.mxu0 0
        %518 = vmatpush1.bf16.msra.mxu0 0
        %519 = vmatprep.mubr.bf16.mxu0 0
        %520 = vmatmul.mubr.bf16.gmra.mrb[0].mxu0 %v485
        %v521 = vpop.f32.mrb[0].mxu0
        %v522 = vadd.f32 %v475, %v521
        %v523 = vpop.f32.mrb[0].mxu0
        %v524 = vpop.f32.mrb[0].mxu0
        %v525 = vpop.f32.mrb[0].mxu0
        %526 = vdwg.mxu0
        %v527 = vxor.u32 %v522, 2147483648
        %v528 = vmul.f32 %v527, 1.442695
        %v529 = vpow.pop %v528
        %v530 = vadd.f32 %v529, 1.0
        %v531 = vrcp.pop %v530
        %v532 = vmul.f32 1.0, %v531
        %v533 = vpack.c.bf16 %v532, %v532
        %v534 = vld [vmem:[%s347] sm:$0xf]
        %s535 = scalar_lea.vmem %s2, 16
        %v536 = vld [vmem:[%s535] sm:$0xf]
        %v537 = vld [vmem:[%s535 + $0x4] sm:$0xf]
        %v538 = vld [vmem:[%s535 + $0x8] sm:$0xf]
        %v539 = vld [vmem:[%s535 + $0xc] sm:$0xf]
        %s540 = scalar_lea.vmem %s3, 1
        %v541 = vld [vmem:[%s540] sm:$0x1]
        %v543 = vlaneseq
        %v544 = vshrl.u32 %v543, 7
        %v545 = vsub.s32 0, %v544
        %v546 = vrot.slane %v541, %v545
        %v552 = vunpack.c.l.b16 %v536
        %v553 = vunpack.c.l.b16 %v537
        %v554 = vunpack.c.l.b16 %v538
        %v555 = vunpack.c.l.b16 %v539
        %v556 = vpack.c.b16 %v553, %v552
        %v557 = vpack.c.b16 %v555, %v554
        %v561 = vsel %vm417, %v534, 0
        %563 = vmatprep.subr.bf16.mxu0 0
        %564 = vmatpush1.bf16.msra.mxu0 %v556
        %565 = vmatprep.subr.bf16.mxu0 0
        %566 = vmatpush1.bf16.msra.mxu0 %v557
        %567 = vmatprep.subr.bf16.mxu0 0
        %568 = vmatpush1.bf16.msra.mxu0 0
        %569 = vmatprep.subr.bf16.mxu0 0
        %570 = vmatpush1.bf16.msra.mxu0 0
        %571 = vmatprep.subr.bf16.mxu0 0
        %572 = vmatpush1.bf16.msra.mxu0 0
        %573 = vmatprep.subr.bf16.mxu0 0
        %574 = vmatpush1.bf16.msra.mxu0 0
        %575 = vmatprep.subr.bf16.mxu0 0
        %576 = vmatpush1.bf16.msra.mxu0 0
        %577 = vmatprep.subr.bf16.mxu0 0
        %578 = vmatpush1.bf16.msra.mxu0 0
        %579 = vmatprep.subr.bf16.mxu0 0
        %580 = vmatpush1.bf16.msra.mxu0 0
        %581 = vmatprep.subr.bf16.mxu0 0
        %582 = vmatpush1.bf16.msra.mxu0 0
        %583 = vmatprep.subr.bf16.mxu0 0
        %584 = vmatpush1.bf16.msra.mxu0 0
        %585 = vmatprep.subr.bf16.mxu0 0
        %586 = vmatpush1.bf16.msra.mxu0 0
        %587 = vmatprep.subr.bf16.mxu0 0
        %588 = vmatpush1.bf16.msra.mxu0 0
        %589 = vmatprep.subr.bf16.mxu0 0
        %590 = vmatpush1.bf16.msra.mxu0 0
        %591 = vmatprep.subr.bf16.mxu0 0
        %592 = vmatpush1.bf16.msra.mxu0 0
        %593 = vmatprep.subr.bf16.mxu0 0
        %594 = vmatpush1.bf16.msra.mxu0 0
        %595 = vmatprep.mubr.bf16.mxu0 0
        %596 = vmatmul.mubr.bf16.gmra.mrb[0].mxu0 %v561
        %v597 = vpop.f32.mrb[0].mxu0
        %v598 = vadd.f32 %v546, %v597
        %v599 = vpop.f32.mrb[0].mxu0
        %v600 = vpop.f32.mrb[0].mxu0
        %v601 = vpop.f32.mrb[0].mxu0
        %602 = vdwg.mxu0
        %v603 = vxor.u32 %v598, 2147483648
        %v604 = vmul.f32 %v603, 1.442695
        %v605 = vpow.pop %v604
        %v606 = vadd.f32 %v605, 1.0
        %v607 = vrcp.pop %v606
        %v608 = vmul.f32 1.0, %v607
        %v609 = vpack.c.bf16 %v608, %v608
        %s610 = scalar_lea.vmem %s4, 8
        %v611 = vld [vmem:[%s610] sm:$0xf]
        %v612 = vld [vmem:[%s610 + $0x4] sm:$0xf]
        %s613 = scalar_lea.vmem %s5, 1
        %v614 = vld [vmem:[%s613] sm:$0x1]
        %v616 = vlaneseq
        %v617 = vshrl.u32 %v616, 7
        %v618 = vsub.s32 0, %v617
        %v619 = vrot.slane %v614, %v618
        %v623 = vunpack.c.l.b16 %v611
        %v624 = vunpack.c.l.b16 %v612
        %v625 = vpack.c.b16 %v624, %v623
        %v628 = vsel %vm483, %v609, 0
        %630 = vmatprep.subr.bf16.mxu0 0
        %631 = vmatpush1.bf16.msra.mxu0 %v625
        %632 = vmatprep.subr.bf16.mxu0 0
        %633 = vmatpush1.bf16.msra.mxu0 0
        %634 = vmatprep.subr.bf16.mxu0 0
        %635 = vmatpush1.bf16.msra.mxu0 0
        %636 = vmatprep.subr.bf16.mxu0 0
        %637 = vmatpush1.bf16.msra.mxu0 0
        %638 = vmatprep.subr.bf16.mxu0 0
        %639 = vmatpush1.bf16.msra.mxu0 0
        %640 = vmatprep.subr.bf16.mxu0 0
        %641 = vmatpush1.bf16.msra.mxu0 0
        %642 = vmatprep.subr.bf16.mxu0 0
        %643 = vmatpush1.bf16.msra.mxu0 0
        %644 = vmatprep.subr.bf16.mxu0 0
        %645 = vmatpush1.bf16.msra.mxu0 0
        %646 = vmatprep.subr.bf16.mxu0 0
        %647 = vmatpush1.bf16.msra.mxu0 0
        %648 = vmatprep.subr.bf16.mxu0 0
        %649 = vmatpush1.bf16.msra.mxu0 0
        %650 = vmatprep.subr.bf16.mxu0 0
        %651 = vmatpush1.bf16.msra.mxu0 0
        %652 = vmatprep.subr.bf16.mxu0 0
        %653 = vmatpush1.bf16.msra.mxu0 0
        %654 = vmatprep.subr.bf16.mxu0 0
        %655 = vmatpush1.bf16.msra.mxu0 0
        %656 = vmatprep.subr.bf16.mxu0 0
        %657 = vmatpush1.bf16.msra.mxu0 0
        %658 = vmatprep.subr.bf16.mxu0 0
        %659 = vmatpush1.bf16.msra.mxu0 0
        %660 = vmatprep.subr.bf16.mxu0 0
        %661 = vmatpush1.bf16.msra.mxu0 0
        %662 = vmatprep.mubr.bf16.mxu0 0
        %663 = vmatmul.mubr.bf16.gmra.mrb[0].mxu0 %v628
        %v664 = vpop.f32.mrb[0].mxu0
        %v665 = vadd.f32 %v619, %v664
        %v666 = vpop.f32.mrb[0].mxu0
        %v667 = vpop.f32.mrb[0].mxu0
        %v668 = vpop.f32.mrb[0].mxu0
        %669 = vdwg.mxu0
        %v670 = vxor.u32 %v665, 2147483648
        %v671 = vmul.f32 %v670, 1.442695
        %v672 = vpow.pop %v671
        %v673 = vadd.f32 %v672, 1.0
        %v674 = vrcp.pop %v673
        %v675 = vmul.f32 1.0, %v674
        %v676 = vpack.c.bf16 %v675, %v675
        %v677 = vld [vmem:[%s8] sm:$0xf]
        %v678 = vld [vmem:[%s8 + $0x4] sm:$0xf]
        %v679 = vld [vmem:[%s8 + $0x8] sm:$0xf]
        %v680 = vld [vmem:[%s8 + $0xc] sm:$0xf]
        %v681 = vld [vmem:[%s9] sm:$0x1]
        %v683 = vlaneseq
        %v684 = vshrl.u32 %v683, 7
        %v685 = vsub.s32 0, %v684
        %v686 = vrot.slane %v681, %v685
        %v692 = vunpack.c.l.b16 %v677
        %v693 = vunpack.c.l.b16 %v678
        %v694 = vunpack.c.l.b16 %v679
        %v695 = vunpack.c.l.b16 %v680
        %v696 = vpack.c.b16 %v693, %v692
        %v697 = vpack.c.b16 %v695, %v694
        %v701 = vsel %vm417, %v533, 0
        %703 = vmatprep.subr.bf16.mxu0 0
        %704 = vmatpush1.bf16.msra.mxu0 %v696
        %705 = vmatprep.subr.bf16.mxu0 0
        %706 = vmatpush1.bf16.msra.mxu0 %v697
        %707 = vmatprep.subr.bf16.mxu0 0
        %708 = vmatpush1.bf16.msra.mxu0 0
        %709 = vmatprep.subr.bf16.mxu0 0
        %710 = vmatpush1.bf16.msra.mxu0 0
        %711 = vmatprep.subr.bf16.mxu0 0
        %712 = vmatpush1.bf16.msra.mxu0 0
        %713 = vmatprep.subr.bf16.mxu0 0
        %714 = vmatpush1.bf16.msra.mxu0 0
        %715 = vmatprep.subr.bf16.mxu0 0
        %716 = vmatpush1.bf16.msra.mxu0 0
        %717 = vmatprep.subr.bf16.mxu0 0
        %718 = vmatpush1.bf16.msra.mxu0 0
        %719 = vmatprep.subr.bf16.mxu0 0
        %720 = vmatpush1.bf16.msra.mxu0 0
        %721 = vmatprep.subr.bf16.mxu0 0
        %722 = vmatpush1.bf16.msra.mxu0 0
        %723 = vmatprep.subr.bf16.mxu0 0
        %724 = vmatpush1.bf16.msra.mxu0 0
        %725 = vmatprep.subr.bf16.mxu0 0
        %726 = vmatpush1.bf16.msra.mxu0 0
        %727 = vmatprep.subr.bf16.mxu0 0
        %728 = vmatpush1.bf16.msra.mxu0 0
        %729 = vmatprep.subr.bf16.mxu0 0
        %730 = vmatpush1.bf16.msra.mxu0 0
        %731 = vmatprep.subr.bf16.mxu0 0
        %732 = vmatpush1.bf16.msra.mxu0 0
        %733 = vmatprep.subr.bf16.mxu0 0
        %734 = vmatpush1.bf16.msra.mxu0 0
        %735 = vmatprep.mubr.bf16.mxu0 0
        %736 = vmatmul.mubr.bf16.gmra.mrb[0].mxu0 %v701
        %v737 = vpop.f32.mrb[0].mxu0
        %v738 = vadd.f32 %v686, %v737
        %v739 = vpop.f32.mrb[0].mxu0
        %v740 = vpop.f32.mrb[0].mxu0
        %v741 = vpop.f32.mrb[0].mxu0
        %742 = vdwg.mxu0
        %v743 = vld [vmem:[%s6] sm:$0xf]
        %v744 = vld [vmem:[%s6 + $0x4] sm:$0xf]
        %v745 = vld [vmem:[%s6 + $0x8] sm:$0xf]
        %v746 = vld [vmem:[%s6 + $0xc] sm:$0xf]
        %v747 = vld [vmem:[%s7] sm:$0x1]
        %v749 = vlaneseq
        %v750 = vshrl.u32 %v749, 7
        %v751 = vsub.s32 0, %v750
        %v752 = vrot.slane %v747, %v751
        %v758 = vunpack.c.l.b16 %v743
        %v759 = vunpack.c.l.b16 %v744
        %v760 = vunpack.c.l.b16 %v745
        %v761 = vunpack.c.l.b16 %v746
        %v762 = vpack.c.b16 %v759, %v758
        %v763 = vpack.c.b16 %v761, %v760
        %766 = vmatprep.subr.bf16.mxu0 0
        %767 = vmatpush1.bf16.msra.mxu0 %v762
        %768 = vmatprep.subr.bf16.mxu0 0
        %769 = vmatpush1.bf16.msra.mxu0 %v763
        %770 = vmatprep.subr.bf16.mxu0 0
        %771 = vmatpush1.bf16.msra.mxu0 0
        %772 = vmatprep.subr.bf16.mxu0 0
        %773 = vmatpush1.bf16.msra.mxu0 0
        %774 = vmatprep.subr.bf16.mxu0 0
        %775 = vmatpush1.bf16.msra.mxu0 0
        %776 = vmatprep.subr.bf16.mxu0 0
        %777 = vmatpush1.bf16.msra.mxu0 0
        %778 = vmatprep.subr.bf16.mxu0 0
        %779 = vmatpush1.bf16.msra.mxu0 0
        %780 = vmatprep.subr.bf16.mxu0 0
        %781 = vmatpush1.bf16.msra.mxu0 0
        %782 = vmatprep.subr.bf16.mxu0 0
        %783 = vmatpush1.bf16.msra.mxu0 0
        %784 = vmatprep.subr.bf16.mxu0 0
        %785 = vmatpush1.bf16.msra.mxu0 0
        %786 = vmatprep.subr.bf16.mxu0 0
        %787 = vmatpush1.bf16.msra.mxu0 0
        %788 = vmatprep.subr.bf16.mxu0 0
        %789 = vmatpush1.bf16.msra.mxu0 0
        %790 = vmatprep.subr.bf16.mxu0 0
        %791 = vmatpush1.bf16.msra.mxu0 0
        %792 = vmatprep.subr.bf16.mxu0 0
        %793 = vmatpush1.bf16.msra.mxu0 0
        %794 = vmatprep.subr.bf16.mxu0 0
        %795 = vmatpush1.bf16.msra.mxu0 0
        %796 = vmatprep.subr.bf16.mxu0 0
        %797 = vmatpush1.bf16.msra.mxu0 0
        %798 = vmatprep.mubr.bf16.mxu0 0
        %799 = vmatmul.mubr.bf16.gmra.mrb[0].mxu0 %v701
        %v800 = vpop.f32.mrb[0].mxu0
        %v801 = vadd.f32 %v752, %v800
        %v802 = vpop.f32.mrb[0].mxu0
        %v803 = vpop.f32.mrb[0].mxu0
        %v804 = vpop.f32.mrb[0].mxu0
        %805 = vdwg.mxu0
        %v806 = vpack.c.bf16 %v801, %v801
        %s807 = scalar_lea.vmem %s6, 16
        %v808 = vld [vmem:[%s807] sm:$0xf]
        %v809 = vld [vmem:[%s807 + $0x4] sm:$0xf]
        %v810 = vld [vmem:[%s807 + $0x8] sm:$0xf]
        %v811 = vld [vmem:[%s807 + $0xc] sm:$0xf]
        %s812 = scalar_lea.vmem %s7, 1
        %v813 = vld [vmem:[%s812] sm:$0x1]
        %v815 = vlaneseq
        %v816 = vshrl.u32 %v815, 7
        %v817 = vsub.s32 0, %v816
        %v818 = vrot.slane %v813, %v817
        %v824 = vunpack.c.l.b16 %v808
        %v825 = vunpack.c.l.b16 %v809
        %v826 = vunpack.c.l.b16 %v810
        %v827 = vunpack.c.l.b16 %v811
        %v828 = vpack.c.b16 %v825, %v824
        %v829 = vpack.c.b16 %v827, %v826
        %832 = vmatprep.subr.bf16.mxu0 0
        %833 = vmatpush1.bf16.msra.mxu0 %v828
        %834 = vmatprep.subr.bf16.mxu0 0
        %835 = vmatpush1.bf16.msra.mxu0 %v829
        %836 = vmatprep.subr.bf16.mxu0 0
        %837 = vmatpush1.bf16.msra.mxu0 0
        %838 = vmatprep.subr.bf16.mxu0 0
        %839 = vmatpush1.bf16.msra.mxu0 0
        %840 = vmatprep.subr.bf16.mxu0 0
        %841 = vmatpush1.bf16.msra.mxu0 0
        %842 = vmatprep.subr.bf16.mxu0 0
        %843 = vmatpush1.bf16.msra.mxu0 0
        %844 = vmatprep.subr.bf16.mxu0 0
        %845 = vmatpush1.bf16.msra.mxu0 0
        %846 = vmatprep.subr.bf16.mxu0 0
        %847 = vmatpush1.bf16.msra.mxu0 0
        %848 = vmatprep.subr.bf16.mxu0 0
        %849 = vmatpush1.bf16.msra.mxu0 0
        %850 = vmatprep.subr.bf16.mxu0 0
        %851 = vmatpush1.bf16.msra.mxu0 0
        %852 = vmatprep.subr.bf16.mxu0 0
        %853 = vmatpush1.bf16.msra.mxu0 0
        %854 = vmatprep.subr.bf16.mxu0 0
        %855 = vmatpush1.bf16.msra.mxu0 0
        %856 = vmatprep.subr.bf16.mxu0 0
        %857 = vmatpush1.bf16.msra.mxu0 0
        %858 = vmatprep.subr.bf16.mxu0 0
        %859 = vmatpush1.bf16.msra.mxu0 0
        %860 = vmatprep.subr.bf16.mxu0 0
        %861 = vmatpush1.bf16.msra.mxu0 0
        %862 = vmatprep.subr.bf16.mxu0 0
        %863 = vmatpush1.bf16.msra.mxu0 0
        %864 = vmatprep.mubr.bf16.mxu0 0
        %865 = vmatmul.mubr.bf16.gmra.mrb[0].mxu0 %v701
        %v866 = vpop.f32.mrb[0].mxu0
        %v867 = vadd.f32 %v818, %v866
        %v868 = vpop.f32.mrb[0].mxu0
        %v869 = vpop.f32.mrb[0].mxu0
        %v870 = vpop.f32.mrb[0].mxu0
        %871 = vdwg.mxu0
        %v872 = vpack.c.bf16 %v867, %v867
        %874 = vset.pattern.permute.xlu0 0
        %875 = vperm.xlu0 %874, %v738
        %v876 = vpop.permute.xlu0 %875
        %v879 = vsel %vm417, %v806, 0
        %v882 = vsel %vm417, %v676, 0
        %884 = vmatprep.subr.bf16.mxu0 0
        %885 = vmatpush1.bf16.xpose.msra.mxu0 %v882
        %886 = vmatprep.subr.bf16.mxu0 0
        %887 = vmatpush1.bf16.xpose.msra.mxu0 0
        %888 = vmatprep.subr.bf16.mxu0 0
        %889 = vmatpush1.bf16.xpose.msra.mxu0 0
        %890 = vmatprep.subr.bf16.mxu0 0
        %891 = vmatpush1.bf16.xpose.msra.mxu0 0
        %892 = vmatprep.subr.bf16.mxu0 0
        %893 = vmatpush1.bf16.xpose.msra.mxu0 0
        %894 = vmatprep.subr.bf16.mxu0 0
        %895 = vmatpush1.bf16.xpose.msra.mxu0 0
        %896 = vmatprep.subr.bf16.mxu0 0
        %897 = vmatpush1.bf16.xpose.msra.mxu0 0
        %898 = vmatprep.subr.bf16.mxu0 0
        %899 = vmatpush1.bf16.xpose.msra.mxu0 0
        %900 = vmatprep.subr.bf16.mxu0 0
        %901 = vmatpush1.bf16.xpose.msra.mxu0 0
        %902 = vmatprep.subr.bf16.mxu0 0
        %903 = vmatpush1.bf16.xpose.msra.mxu0 0
        %904 = vmatprep.subr.bf16.mxu0 0
        %905 = vmatpush1.bf16.xpose.msra.mxu0 0
        %906 = vmatprep.subr.bf16.mxu0 0
        %907 = vmatpush1.bf16.xpose.msra.mxu0 0
        %908 = vmatprep.subr.bf16.mxu0 0
        %909 = vmatpush1.bf16.xpose.msra.mxu0 0
        %910 = vmatprep.subr.bf16.mxu0 0
        %911 = vmatpush1.bf16.xpose.msra.mxu0 0
        %912 = vmatprep.subr.bf16.mxu0 0
        %913 = vmatpush1.bf16.xpose.msra.mxu0 0
        %914 = vmatprep.subr.bf16.mxu0 0
        %915 = vmatpush1.bf16.xpose.msra.mxu0 0
        %916 = vmatprep.mubr.bf16.mxu0 0
        %917 = vmatmul.mubr.bf16.gmra.mrb[0].mxu0 %v879
        %v918 = vpop.f32.mrb[0].mxu0
        %v919 = vadd.f32 %v876, %v918
        %v920 = vpop.f32.mrb[0].mxu0
        %v921 = vpop.f32.mrb[0].mxu0
        %v922 = vpop.f32.mrb[0].mxu0
        %923 = vdwg.mxu0
        %vm924 = vcmask 64512
        %925 = vst.msk [vmem:[%s387] sm:$0xff] %vm924, %v919
        %926 = vset.pattern.permute.xlu0 1
        %927 = vperm.xlu0 %926, %v738
        %v928 = vpop.permute.xlu0 %927
        %v931 = vsel %vm417, %v872, 0
        %933 = vmatprep.subr.bf16.mxu0 0
        %934 = vmatpush1.bf16.xpose.msra.mxu0 %v882
        %935 = vmatprep.subr.bf16.mxu0 0
        %936 = vmatpush1.bf16.xpose.msra.mxu0 0
        %937 = vmatprep.subr.bf16.mxu0 0
        %938 = vmatpush1.bf16.xpose.msra.mxu0 0
        %939 = vmatprep.subr.bf16.mxu0 0
        %940 = vmatpush1.bf16.xpose.msra.mxu0 0
        %941 = vmatprep.subr.bf16.mxu0 0
        %942 = vmatpush1.bf16.xpose.msra.mxu0 0
        %943 = vmatprep.subr.bf16.mxu0 0
        %944 = vmatpush1.bf16.xpose.msra.mxu0 0
        %945 = vmatprep.subr.bf16.mxu0 0
        %946 = vmatpush1.bf16.xpose.msra.mxu0 0
        %947 = vmatprep.subr.bf16.mxu0 0
        %948 = vmatpush1.bf16.xpose.msra.mxu0 0
        %949 = vmatprep.subr.bf16.mxu0 0
        %950 = vmatpush1.bf16.xpose.msra.mxu0 0
        %951 = vmatprep.subr.bf16.mxu0 0
        %952 = vmatpush1.bf16.xpose.msra.mxu0 0
        %953 = vmatprep.subr.bf16.mxu0 0
        %954 = vmatpush1.bf16.xpose.msra.mxu0 0
        %955 = vmatprep.subr.bf16.mxu0 0
        %956 = vmatpush1.bf16.xpose.msra.mxu0 0
        %957 = vmatprep.subr.bf16.mxu0 0
        %958 = vmatpush1.bf16.xpose.msra.mxu0 0
        %959 = vmatprep.subr.bf16.mxu0 0
        %960 = vmatpush1.bf16.xpose.msra.mxu0 0
        %961 = vmatprep.subr.bf16.mxu0 0
        %962 = vmatpush1.bf16.xpose.msra.mxu0 0
        %963 = vmatprep.subr.bf16.mxu0 0
        %964 = vmatpush1.bf16.xpose.msra.mxu0 0
        %965 = vmatprep.mubr.bf16.mxu0 0
        %966 = vmatmul.mubr.bf16.gmra.mrb[0].mxu0 %v931
        %v967 = vpop.f32.mrb[0].mxu0
        %v968 = vadd.f32 %v928, %v967
        %v969 = vpop.f32.mrb[0].mxu0
        %v970 = vpop.f32.mrb[0].mxu0
        %v971 = vpop.f32.mrb[0].mxu0
        %972 = vdwg.mxu0
        %s973 = scalar_lea.vmem %s387, 8 [#allocation5]
        %974 = vst.msk [vmem:[%s973] sm:$0xff] %vm924, %v968
        %s975 = sand.u32 %s255, 1
        %s976 = scalar_lea.sflag [#allocation4], %s975
        %s977 = sand.u32 %s255, 1
        %s978 = smul.addr %s977, 16
        %s979 = scalar_lea.vmem [#allocation5], %s978
        // Predicated region
        $region65: #{tpu_custom_call.1} parent=59 // pred_check
          %p980 = pneg %p265
        $region66: #{tpu_custom_call.1} parent=59 // pred_check_branch
          %982 = sbr.rel (%p980) target = $region68
        $region67: #{tpu_custom_call.1} parent=59 // pred_region
          %s984 = ssub.s32 256, 256
          %985 = vsyncadd %s976, %s984
          %s986 = smul.addr %s27, 2
          %s987 = smul.addr %s986, 128
          %s988 = scalar_lea.hbm %s10, %s987
          %s989 = sshll.u32 %s979, 4
          %s990 = int_to_ptr.vmem [resolvable:$true] %s989
          %995 = dma.vmem_to_hbm [thread:$0]  %s990, 256, %s988, %s976, 128, 128, 8
        $region68: #{tpu_custom_call.1} parent=59 // pred_fallthru
          _
      $region60: #{tpu_custom_call.1} parent=5 // pred_fallthru
        _
      %p996 = scmp.le.s32.totalorder 2, %s22
      // Predicated region
      $region69: #{tpu_custom_call.1} parent=5 // pred_check
        %p997 = pneg %p996
      $region70: #{tpu_custom_call.1} parent=5 // pred_check_branch
        %999 = sbr.rel (%p997) target = $region72
      $region71: #{tpu_custom_call.1} parent=5 // pred_region
        %s1000 = ssub.s32 %s22, 2
        // Predicated region
        $region73: #{tpu_custom_call.1} parent=71 // pred_check
          %p1001 = pneg %p271
        $region74: #{tpu_custom_call.1} parent=71 // pred_check_branch
          %1003 = sbr.rel (%p1001) target = $region76
        $region75: #{tpu_custom_call.1} parent=71 // pred_region
          %s1004 = sand.u32 %s256, 1
          %s1005 = scalar_lea.sflag [#allocation4], %s1004
          %s1006 = sand.u32 %s256, 1
          %s1007 = smul.addr %s1006, 16
          %s1008 = scalar_lea.vmem [#allocation5], %s1007
          %1009 = dma.done %s1005, 256
        $region76: #{tpu_custom_call.1} parent=71 // pred_fallthru
          _
      $region72: #{tpu_custom_call.1} parent=5 // pred_fallthru
        _
    $region6: #{tpu_custom_call.1} parent=1 // loop_footer
      %s26 = sadd.s32 1, %s22
    $region7: #{tpu_custom_call.1} parent=1 // loop_footer_branch
      %21 = sbr.rel target = $region3
    $region8: #{tpu_custom_call.1} parent=1 // loop_exit
      _
    %1010 = vsyncpa [#allocation3], 1
    %s1011 = scalar_lea.sflag [#allocation3], 1
    %1012 = vsyncpa %s1011, 1
    %1013 = vsyncpa [#allocation4], 1
    %s1014 = scalar_lea.sflag [#allocation4], 1
    %1015 = vsyncpa %s1014, 1

</llo_original>
